<compile_context>
chip_gen: v5e
topology: v5e:2x2
jax: 0.10.0
libtpu: 0.0.40
codegen_flags: <defaults>
</compile_context>

<pallas_src>
import jax
import jax.numpy as jnp
from jax.experimental import pallas as pl
from jax.experimental.pallas import tpu as pltpu


def _round_up(n: int, m: int) -> int:
    return (n + m - 1) // m * m


def qnetwork_kernel(x_ref, w1_ref, b1_ref, w2_ref, b2_ref, w3_ref, b3_ref, o_ref):
    """Forward pass for one batch tile, entirely in VMEM.

    x:  (TB, obs_dim)  f32   (cast to bf16 in-kernel)
    w1: (obs_dim, HP)  bf16, b1: (1, HP)        f32
    w2: (HP, HP)       bf16, b2: (1, HP)        f32
    w3: (HP, AP)       f32,  b3: (1, n_actions) f32
    o:  (TB, n_actions) f32
    """
    n_actions = o_ref.shape[-1]

    # fc1 + relu1 (bf16 MXU, f32 accumulate); VPU cast of x is free.
    x = x_ref[...].astype(jnp.bfloat16)
    h = jnp.dot(x, w1_ref[...], preferred_element_type=jnp.float32)
    h = jnp.maximum(h + b1_ref[...], 0.0)

    # fc2 + relu2
    h = jnp.dot(h.astype(jnp.bfloat16), w2_ref[...], preferred_element_type=jnp.float32)
    h = jnp.maximum(h + b2_ref[...], 0.0)

    # out: keep the last layer in f32 (compute slack -> free, better numerics).
    q = jnp.dot(h, w3_ref[...], preferred_element_type=jnp.float32)
    o_ref[...] = (q[:, :n_actions] + b3_ref[...]).astype(o_ref.dtype)


def prepare_params(params):
    """One-time pad/cast of the (in,out)-layout params into kernel layout.

    Feature dims are zero-padded to lane-dense multiples of 128 (exact: padded
    weight rows/cols and padded biases contribute nothing). Layers 1-2 are cast
    to bf16 for the MXU; the final layer stays f32. Call once, reuse per step.
    """
    w1, b1, w2, b2, w3, b3 = params
    obs_dim, hidden = w1.shape
    n_actions = w3.shape[1]
    HP = _round_up(hidden, 128)
    AP = _round_up(n_actions, 128)

    bf16, f32 = jnp.bfloat16, jnp.float32
    w1p = jnp.zeros((obs_dim, HP), bf16).at[:, :hidden].set(w1.astype(bf16))
    b1p = jnp.zeros((1, HP), f32).at[:, :hidden].set(b1.astype(f32))
    w2p = jnp.zeros((HP, HP), bf16).at[:hidden, :hidden].set(w2.astype(bf16))
    b2p = jnp.zeros((1, HP), f32).at[:, :hidden].set(b2.astype(f32))
    w3p = jnp.zeros((HP, AP), f32).at[:hidden, :n_actions].set(w3.astype(f32))
    b3p = b3.astype(f32).reshape(1, n_actions)  # unpadded: also carries n_actions
    return (w1p, b1p, w2p, b2p, w3p, b3p)


def qnetwork_forward(x, prepared_params, tile_batch: int = 4096):
    """x: (batch, obs_dim) float32 -> (batch, n_actions) float32."""
    w1p, b1p, w2p, b2p, w3p, b3p = prepared_params
    batch, obs_dim = x.shape
    assert obs_dim == w1p.shape[0], (obs_dim, w1p.shape)
    HP = w2p.shape[0]
    AP = w3p.shape[1]
    n_actions = b3p.shape[1]

    # Batch tile: multiple of 8 rows (f32 sublanes), capped at tile_batch.
    TB = min(_round_up(batch, 8), _round_up(tile_batch, 8))
    # v7x has 2 TensorCores: prefer >=2 grid tiles so both get work
    # (harmless extra ~0.35us pipeline step on 1-TC v5e/v6e).
    if batch <= TB and batch > 8:
        TB = _round_up((batch + 1) // 2, 8)
    BP = _round_up(batch, TB)
    grid = (BP // TB,)

    # Pad batch rows only (no feature-dim padding of x, no dtype pass).
    xp = x if BP == batch else jnp.pad(x, ((0, BP - batch), (0, 0)))

    # Advisory cost: real flops / real bytes (x read, narrow Q write, weights).
    flops = 2 * BP * (obs_dim * HP + HP * HP + HP * AP)
    bytes_accessed = (
        BP * obs_dim * 4 + BP * n_actions * 4
        + obs_dim * HP * 2 + HP * HP * 2 + HP * AP * 4
        + (2 * HP + n_actions) * 4
    )

    out_padded = pl.pallas_call(
        qnetwork_kernel,
        out_shape=jax.ShapeDtypeStruct((BP, n_actions), jnp.float32),
        grid=grid,
        in_specs=[
            # x: tiled over the batch grid axis, unpadded feature dim.
            pl.BlockSpec((TB, obs_dim), lambda i: (i, 0)),
            # weights / biases: constant index_map -> VMEM-resident across tiles.
            pl.BlockSpec((obs_dim, HP), lambda i: (0, 0)),
            pl.BlockSpec((1, HP), lambda i: (0, 0)),
            pl.BlockSpec((HP, HP), lambda i: (0, 0)),
            pl.BlockSpec((1, HP), lambda i: (0, 0)),
            pl.BlockSpec((HP, AP), lambda i: (0, 0)),
            pl.BlockSpec((1, n_actions), lambda i: (0, 0)),
        ],
        out_specs=pl.BlockSpec((TB, n_actions), lambda i: (i, 0)),
        compiler_params=pltpu.CompilerParams(
            dimension_semantics=("parallel",),  # batch tiles are independent
            vmem_limit_bytes=32 * 1024 * 1024,  # explicit budget (safe on v5e/v6e/v7x)
        ),
        cost_estimate=pl.CostEstimate(
            flops=flops, transcendentals=0, bytes_accessed=bytes_accessed
        ),
    )(xp, w1p, b1p, w2p, b2p, w3p, b3p)

    # Drop padded batch rows (already narrow in the action dim).
    return out_padded if BP == batch else out_padded[:batch]


def init_params(key, obs_dim, n_actions, hidden_dim=64, depth=3):
    """nn.Linear-style init: U(-1/sqrt(fan_in), +1/sqrt(fan_in)).

    Weights returned in (in, out) layout (transposed vs PyTorch storage).
    depth=3 -> fc1, fc2, out (matches the reference module's default).
    """
    assert depth == 3, "kernel is specialized to the default depth=3 architecture"
    dims = [(obs_dim, hidden_dim), (hidden_dim, hidden_dim), (hidden_dim, n_actions)]
    params = []
    for fan_in, fan_out in dims:
        key, kw, kb = jax.random.split(key, 3)
        bound = 1.0 / jnp.sqrt(float(fan_in))
        w = jax.random.uniform(kw, (fan_in, fan_out), jnp.float32, -bound, bound)
        b = jax.random.uniform(kb, (1, fan_out), jnp.float32, -bound, bound)
        params.extend([w, b])
    return tuple(params)


def reference_forward(x, params):
    """Plain-JAX f32 reference for correctness checking."""
    w1, b1, w2, b2, w3, b3 = params
    h = jnp.maximum(x @ w1 + b1, 0.0)
    h = jnp.maximum(h @ w2 + b2, 0.0)
    return h @ w3 + b3


if __name__ == "__main__":
    key = jax.random.PRNGKey(0)
    obs_dim, n_actions, hidden_dim = 16, 4, 64  # module defaults (hidden_dim=64)

    key, kp = jax.random.split(key)
    raw_params = init_params(kp, obs_dim, n_actions, hidden_dim=hidden_dim, depth=3)
    prepared = prepare_params(raw_params)          # one-time pad/cast
    fwd = jax.jit(qnetwork_forward)                # fuse remaining pad/slice around the call

    # bf16 MXU path for layers 1-2 -> compare against f32 reference loosely.
    for batch in (8, 37):  # 37 exercises batch pad/slice + multi-tile grid
        key, kx = jax.random.split(key)
        x = jax.random.normal(kx, (batch, obs_dim), jnp.float32)

        q = jax.block_until_ready(fwd(x, prepared))
        q_ref = reference_forward(x, raw_params)

        assert q.shape == (batch, n_actions), q.shape
        assert jnp.allclose(q, q_ref, atol=5e-2, rtol=5e-2), (
            "mismatch vs JAX reference: max abs err "
            f"{float(jnp.max(jnp.abs(q - q_ref)))}"
        )

    print("KERNEL_OK")
</pallas_src>

<mosaic_0001>
module attributes {stable_mosaic.version = 11 : i64} {
  func.func @qnetwork_kernel(%arg0: i32, %arg1: memref<8x16xf32, #tpu.memory_space<vmem>>, %arg2: memref<16x128xbf16, #tpu.memory_space<vmem>>, %arg3: memref<1x128xf32, #tpu.memory_space<vmem>>, %arg4: memref<128x128xbf16, #tpu.memory_space<vmem>>, %arg5: memref<1x128xf32, #tpu.memory_space<vmem>>, %arg6: memref<128x128xf32, #tpu.memory_space<vmem>>, %arg7: memref<1x4xf32, #tpu.memory_space<vmem>>, %arg8: memref<8x4xf32, #tpu.memory_space<vmem>>) attributes {dimension_semantics = [#tpu.dimension_semantics<parallel>], iteration_bounds = array<i64: 1>, scalar_prefetch = 0 : i64, scratch_operands = 0 : i64, tpu.core_type = #tpu.core_type<tc>, window_params = [{transform_indices = @transform_0, window_bounds = array<i64: 8, 16>}, {pipeline_mode = #tpu.pipeline_mode<synchronous>, transform_indices = @transform_1, window_bounds = array<i64: 16, 128>}, {pipeline_mode = #tpu.pipeline_mode<synchronous>, transform_indices = @transform_2, window_bounds = array<i64: 1, 128>}, {pipeline_mode = #tpu.pipeline_mode<synchronous>, transform_indices = @transform_3, window_bounds = array<i64: 128, 128>}, {pipeline_mode = #tpu.pipeline_mode<synchronous>, transform_indices = @transform_4, window_bounds = array<i64: 1, 128>}, {pipeline_mode = #tpu.pipeline_mode<synchronous>, transform_indices = @transform_5, window_bounds = array<i64: 128, 128>}, {pipeline_mode = #tpu.pipeline_mode<synchronous>, transform_indices = @transform_6, window_bounds = array<i64: 1, 4>}, {transform_indices = @transform_7, window_bounds = array<i64: 8, 4>}]} {
    %c0 = arith.constant 0 : index
    %c0_0 = arith.constant 0 : index
    %0 = vector.load %arg1[%c0, %c0_0] : memref<8x16xf32, #tpu.memory_space<vmem>>, vector<8x16xf32>
    %1 = arith.truncf %0 : vector<8x16xf32> to vector<8x16xbf16>
    %c0_1 = arith.constant 0 : index
    %c0_2 = arith.constant 0 : index
    %2 = vector.load %arg2[%c0_1, %c0_2] : memref<16x128xbf16, #tpu.memory_space<vmem>>, vector<16x128xbf16>
    %cst = arith.constant dense<0.000000e+00> : vector<8x128xf32>
    %3 = tpu.matmul %1, %2, %cst {dimension_numbers = #tpu.dot_dimension_numbers<[1], [0], [0], [1], [0, 0, 1, 1], [], []>} : vector<8x16xbf16>, vector<16x128xbf16>, vector<8x128xf32> -> vector<8x128xf32>
    %c0_3 = arith.constant 0 : index
    %c0_4 = arith.constant 0 : index
    %4 = vector.load %arg3[%c0_3, %c0_4] : memref<1x128xf32, #tpu.memory_space<vmem>>, vector<1x128xf32>
    %5 = vector.broadcast %4 : vector<1x128xf32> to vector<8x128xf32>
    %6 = arith.addf %3, %5 : vector<8x128xf32>
    %cst_5 = arith.constant 0.000000e+00 : f32
    %7 = vector.broadcast %cst_5 : f32 to vector<8x128xf32>
    %8 = arith.maximumf %6, %7 : vector<8x128xf32>
    %9 = arith.truncf %8 : vector<8x128xf32> to vector<8x128xbf16>
    %c0_6 = arith.constant 0 : index
    %c0_7 = arith.constant 0 : index
    %10 = vector.load %arg4[%c0_6, %c0_7] : memref<128x128xbf16, #tpu.memory_space<vmem>>, vector<128x128xbf16>
    %cst_8 = arith.constant dense<0.000000e+00> : vector<8x128xf32>
    %11 = tpu.matmul %9, %10, %cst_8 {dimension_numbers = #tpu.dot_dimension_numbers<[1], [0], [0], [1], [0, 0, 1, 1], [], []>} : vector<8x128xbf16>, vector<128x128xbf16>, vector<8x128xf32> -> vector<8x128xf32>
    %c0_9 = arith.constant 0 : index
    %c0_10 = arith.constant 0 : index
    %12 = vector.load %arg5[%c0_9, %c0_10] : memref<1x128xf32, #tpu.memory_space<vmem>>, vector<1x128xf32>
    %13 = vector.broadcast %12 : vector<1x128xf32> to vector<8x128xf32>
    %14 = arith.addf %11, %13 : vector<8x128xf32>
    %cst_11 = arith.constant 0.000000e+00 : f32
    %15 = vector.broadcast %cst_11 : f32 to vector<8x128xf32>
    %16 = arith.maximumf %14, %15 : vector<8x128xf32>
    %c0_12 = arith.constant 0 : index
    %c0_13 = arith.constant 0 : index
    %17 = vector.load %arg6[%c0_12, %c0_13] : memref<128x128xf32, #tpu.memory_space<vmem>>, vector<128x128xf32>
    %cst_14 = arith.constant dense<0.000000e+00> : vector<8x128xf32>
    %18 = tpu.matmul %16, %17, %cst_14 {dimension_numbers = #tpu.dot_dimension_numbers<[1], [0], [0], [1], [0, 0, 1, 1], [], []>} : vector<8x128xf32>, vector<128x128xf32>, vector<8x128xf32> -> vector<8x128xf32>
    %19 = vector.extract_strided_slice %18 {offsets = [0, 0], sizes = [8, 4], strides = [1, 1]} : vector<8x128xf32> to vector<8x4xf32>
    %c0_15 = arith.constant 0 : index
    %c0_16 = arith.constant 0 : index
    %20 = vector.load %arg7[%c0_15, %c0_16] : memref<1x4xf32, #tpu.memory_space<vmem>>, vector<1x4xf32>
    %21 = vector.broadcast %20 : vector<1x4xf32> to vector<8x4xf32>
    %22 = arith.addf %19, %21 : vector<8x4xf32>
    %c0_17 = arith.constant 0 : index
    %c0_18 = arith.constant 0 : index
    %23 = vector.load %arg8[%c0_17, %c0_18] : memref<8x4xf32, #tpu.memory_space<vmem>>, vector<8x4xf32>
    tpu.vector_store %arg8[%c0_17, %c0_18], %22 {strides = array<i32>} : memref<8x4xf32, #tpu.memory_space<vmem>>, vector<8x4xf32>,
    return
  }
  func.func @transform_0(%arg0: i32) -> (i32, i32) {
    %c0_i32 = arith.constant 0 : i32
    %c0_i32_0 = arith.constant 0 : i32
    return %arg0, %c0_i32 : i32, i32
  }
  func.func @transform_1(%arg0: i32) -> (i32, i32) {
    %c0_i32 = arith.constant 0 : i32
    %c0_i32_0 = arith.constant 0 : i32
    %c0_i32_1 = arith.constant 0 : i32
    return %c0_i32, %c0_i32_0 : i32, i32
  }
  func.func @transform_2(%arg0: i32) -> (i32, i32) {
    %c0_i32 = arith.constant 0 : i32
    %c0_i32_0 = arith.constant 0 : i32
    %c0_i32_1 = arith.constant 0 : i32
    return %c0_i32, %c0_i32_0 : i32, i32
  }
  func.func @transform_3(%arg0: i32) -> (i32, i32) {
    %c0_i32 = arith.constant 0 : i32
    %c0_i32_0 = arith.constant 0 : i32
    %c0_i32_1 = arith.constant 0 : i32
    return %c0_i32, %c0_i32_0 : i32, i32
  }
  func.func @transform_4(%arg0: i32) -> (i32, i32) {
    %c0_i32 = arith.constant 0 : i32
    %c0_i32_0 = arith.constant 0 : i32
    %c0_i32_1 = arith.constant 0 : i32
    return %c0_i32, %c0_i32_0 : i32, i32
  }
  func.func @transform_5(%arg0: i32) -> (i32, i32) {
    %c0_i32 = arith.constant 0 : i32
    %c0_i32_0 = arith.constant 0 : i32
    %c0_i32_1 = arith.constant 0 : i32
    return %c0_i32, %c0_i32_0 : i32, i32
  }
  func.func @transform_6(%arg0: i32) -> (i32, i32) {
    %c0_i32 = arith.constant 0 : i32
    %c0_i32_0 = arith.constant 0 : i32
    %c0_i32_1 = arith.constant 0 : i32
    return %c0_i32, %c0_i32_0 : i32, i32
  }
  func.func @transform_7(%arg0: i32) -> (i32, i32) {
    %c0_i32 = arith.constant 0 : i32
    %c0_i32_0 = arith.constant 0 : i32
    return %arg0, %c0_i32 : i32, i32
  }
}

</mosaic_0001>

<llo_original>
// kernel: qnetwork_forward.1
$region0: #{qnetwork_forward.1}
  #allocation0 [shape = 'u32[]', space=smem, size = 0x4, offset = 0x4, fixed_abs, tag = 'smem constant byte address 0x4 - core index']
  #allocation1 [shape = 'u32[72,128]{1,0:T(1,128)}', space=vmem, size = 0x9000, scoped, tag = 'internal scratch']
  %s0 = inlined_call_operand.hbm [shape: f32[8,16], index: 0, kind: input, shape index: {}]
  %s1 = inlined_call_operand.hbm [shape: bf16[16,128], index: 1, kind: input, shape index: {}]
  %s2 = inlined_call_operand.vmem [shape: f32[1,128], index: 2, kind: input, shape index: {}]
  %s3 = inlined_call_operand.hbm [shape: bf16[128,128], index: 3, kind: input, shape index: {}]
  %s4 = inlined_call_operand.vmem [shape: f32[1,128], index: 4, kind: input, shape index: {}]
  %s5 = inlined_call_operand.hbm [shape: f32[128,128], index: 5, kind: input, shape index: {}]
  %s6 = inlined_call_operand.vmem [shape: f32[1,4], index: 6, kind: input, shape index: {}]
  %s7 = inlined_call_operand.vmem [shape: f32[8,4], index: 7, kind: output, shape index: {}]
  %s8 = sld [smem:[#allocation0]]
  $region54: #{qnetwork_forward.1} parent=0
    _
  %s10 = ssub.s32 1, %s8
  %s11 = scalar_select 0, %s10, %s8
  $region1: #{qnetwork_forward.1} parent=0
    #allocation2 [shape = 'u8[4096]{0}', space=vmem, size = 0x1000, scoped, tag = 'input window, operand 0, single buffered']
    #allocation3 [shape = 's32[1]{0}', space=sflag, size = 0x4, scoped, tag = 'scoped memory for qnetwork_forward.1']
    #allocation4 [shape = 'u8[4096]{0}', space=vmem, size = 0x1000, scoped, tag = 'input window, operand 1, single buffered']
    #allocation5 [shape = 's32[1]{0}', space=sflag, size = 0x4, scoped, tag = 'scoped memory for qnetwork_forward.1']
    #allocation6 [shape = 'u8[32768]{0}', space=vmem, size = 0x8000, scoped, tag = 'input window, operand 3, single buffered']
    #allocation7 [shape = 'u8[65536]{0}', space=vmem, size = 0x10000, scoped, tag = 'input window, operand 5, single buffered']
    #allocation8 [shape = 's32[1]{0}', space=sflag, size = 0x4, scoped, tag = 'scoped memory for qnetwork_forward.1']
    %12 = vsyncpa [#allocation3], 0
    %13 = vsyncpa [#allocation5], 0
    %14 = vsyncpa [#allocation8], 0
    // Predicated region
    $region2: #{qnetwork_forward.1} parent=1 // pred_check
      _
    $region3: #{qnetwork_forward.1} parent=1 // pred_check_branch
      %16 = sbr.rel (0) target = $region5
    $region4: #{qnetwork_forward.1} parent=1 // pred_region
      %18 = vsyncadd [#allocation3], 0
      %s20 = sshll.u32 %s0, 4
      %s21 = int_to_ptr.hbm [resolvable:$true] %s20
      %s22 = sshll.u32 [#allocation2], 4
      %s23 = int_to_ptr.vmem [resolvable:$true] %s22
      %25 = dma.hbm_to_vmem [thread:$0]  %s21, 128, %s23, [#allocation3]
    $region5: #{qnetwork_forward.1} parent=1 // pred_fallthru
      _
    // Predicated region
    $region6: #{qnetwork_forward.1} parent=1 // pred_check
      _
    $region7: #{qnetwork_forward.1} parent=1 // pred_check_branch
      %27 = sbr.rel (0) target = $region9
    $region8: #{qnetwork_forward.1} parent=1 // pred_region
      %29 = vsyncadd [#allocation5], 0
      %s30 = sshll.u32 %s1, 4
      %s31 = int_to_ptr.hbm [resolvable:$true] %s30
      %s32 = sshll.u32 [#allocation4], 4
      %s33 = int_to_ptr.vmem [resolvable:$true] %s32
      %38 = dma.hbm_to_vmem [thread:$0]  %s31, 128, %s33, [#allocation5], 64, 64, 4
    $region9: #{qnetwork_forward.1} parent=1 // pred_fallthru
      _
    // Predicated region
    $region10: #{qnetwork_forward.1} parent=1 // pred_check
      _
    $region11: #{qnetwork_forward.1} parent=1 // pred_check_branch
      %40 = sbr.rel (0) target = $region13
    $region12: #{qnetwork_forward.1} parent=1 // pred_region
      _
    $region13: #{qnetwork_forward.1} parent=1 // pred_fallthru
      _
    // Predicated region
    $region14: #{qnetwork_forward.1} parent=1 // pred_check
      _
    $region15: #{qnetwork_forward.1} parent=1 // pred_check_branch
      %42 = sbr.rel (0) target = $region17
    $region16: #{qnetwork_forward.1} parent=1 // pred_region
      %44 = vsyncadd [#allocation5], 0
      %s45 = sshll.u32 %s3, 4
      %s46 = int_to_ptr.hbm [resolvable:$true] %s45
      %s47 = sshll.u32 [#allocation6], 4
      %s48 = int_to_ptr.vmem [resolvable:$true] %s47
      %53 = dma.hbm_to_vmem [thread:$0]  %s46, 1024, %s48, [#allocation5], 64, 64, 4
    $region17: #{qnetwork_forward.1} parent=1 // pred_fallthru
      _
    // Predicated region
    $region18: #{qnetwork_forward.1} parent=1 // pred_check
      _
    $region19: #{qnetwork_forward.1} parent=1 // pred_check_branch
      %55 = sbr.rel (0) target = $region21
    $region20: #{qnetwork_forward.1} parent=1 // pred_region
      _
    $region21: #{qnetwork_forward.1} parent=1 // pred_fallthru
      _
    // Predicated region
    $region22: #{qnetwork_forward.1} parent=1 // pred_check
      _
    $region23: #{qnetwork_forward.1} parent=1 // pred_check_branch
      %57 = sbr.rel (0) target = $region25
    $region24: #{qnetwork_forward.1} parent=1 // pred_region
      %59 = vsyncadd [#allocation8], 0
      %s60 = sshll.u32 %s5, 4
      %s61 = int_to_ptr.hbm [resolvable:$true] %s60
      %s62 = sshll.u32 [#allocation7], 4
      %s63 = int_to_ptr.vmem [resolvable:$true] %s62
      %68 = dma.hbm_to_vmem [thread:$0]  %s61, 2048, %s63, [#allocation8], 128, 128, 8
    $region25: #{qnetwork_forward.1} parent=1 // pred_fallthru
      _
    // Predicated region
    $region26: #{qnetwork_forward.1} parent=1 // pred_check
      _
    $region27: #{qnetwork_forward.1} parent=1 // pred_check_branch
      %70 = sbr.rel (0) target = $region29
    $region28: #{qnetwork_forward.1} parent=1 // pred_region
      _
    $region29: #{qnetwork_forward.1} parent=1 // pred_fallthru
      _
    // Predicated region
    $region30: #{qnetwork_forward.1} parent=1 // pred_check
      _
    $region31: #{qnetwork_forward.1} parent=1 // pred_check_branch
      %72 = sbr.rel (0) target = $region33
    $region32: #{qnetwork_forward.1} parent=1 // pred_region
      %74 = dma.done [#allocation3], 128
    $region33: #{qnetwork_forward.1} parent=1 // pred_fallthru
      _
    // Predicated region
    $region34: #{qnetwork_forward.1} parent=1 // pred_check
      _
    $region35: #{qnetwork_forward.1} parent=1 // pred_check_branch
      %76 = sbr.rel (0) target = $region37
    $region36: #{qnetwork_forward.1} parent=1 // pred_region
      %78 = dma.done [#allocation5], 128
    $region37: #{qnetwork_forward.1} parent=1 // pred_fallthru
      _
    // Predicated region
    $region38: #{qnetwork_forward.1} parent=1 // pred_check
      _
    $region39: #{qnetwork_forward.1} parent=1 // pred_check_branch
      %80 = sbr.rel (0) target = $region41
    $region40: #{qnetwork_forward.1} parent=1 // pred_region
      %82 = dma.done [#allocation5], 1024
    $region41: #{qnetwork_forward.1} parent=1 // pred_fallthru
      _
    // Predicated region
    $region42: #{qnetwork_forward.1} parent=1 // pred_check
      _
    $region43: #{qnetwork_forward.1} parent=1 // pred_check_branch
      %84 = sbr.rel (0) target = $region45
    $region44: #{qnetwork_forward.1} parent=1 // pred_region
      %86 = dma.done [#allocation8], 2048
    $region45: #{qnetwork_forward.1} parent=1 // pred_fallthru
      _
    %v88 = vld [vmem:[#allocation2] sm:$0xff]
    %v89 = vpack.c.bf16 %v88, %v88
    %v90 = vld [vmem:[#allocation4] sm:$0xf]
    %v91 = vld [vmem:[#allocation4 + $0x4] sm:$0xf]
    %v92 = vld [vmem:[%s2] sm:$0x1]
    %v94 = vperm.slane %v92, 0
    %v98 = vunpack.c.l.b16 %v90
    %v99 = vunpack.c.l.b16 %v91
    %v100 = vpack.c.b16 %v99, %v98
    %vm102 = vcmask 130048
    %v104 = vsel %vm102, %v89, 0
    %106 = vmatpush.bf16.msra.mxu0 0
    %107 = vmatpush.bf16.msra.mxu0 0
    %108 = vmatpush.bf16.msra.mxu0 0
    %109 = vmatpush.bf16.msra.mxu0 0
    %110 = vmatpush.bf16.msra.mxu0 0
    %111 = vmatpush.bf16.msra.mxu0 0
    %112 = vmatpush.bf16.msra.mxu0 0
    %113 = vmatpush.bf16.msra.mxu0 %v100
    %114 = vmatmul.bf16.gmra.mxu0 %v104
    %v115 = vpop.f32.mrf.mxu0
    %v116 = vadd.f32 %v94, %v115
    %v117 = vpop.f32.mrf.mxu0
    %118 = vdwg.mxu0
    %v119 = vmax.f32 %v116, 0.0
    %v120 = vpack.c.bf16 %v119, %v119
    %v121 = vld [vmem:[#allocation6] sm:$0xf]
    %v122 = vld [vmem:[#allocation6 + $0x4] sm:$0xf]
    %v123 = vld [vmem:[#allocation6 + $0x8] sm:$0xf]
    %v124 = vld [vmem:[#allocation6 + $0xc] sm:$0xf]
    %v125 = vld [vmem:[#allocation6 + $0x10] sm:$0xf]
    %v126 = vld [vmem:[#allocation6 + $0x14] sm:$0xf]
    %v127 = vld [vmem:[#allocation6 + $0x18] sm:$0xf]
    %v128 = vld [vmem:[#allocation6 + $0x1c] sm:$0xf]
    %v129 = vld [vmem:[#allocation6 + $0x20] sm:$0xf]
    %v130 = vld [vmem:[#allocation6 + $0x24] sm:$0xf]
    %v131 = vld [vmem:[#allocation6 + $0x28] sm:$0xf]
    %v132 = vld [vmem:[#allocation6 + $0x2c] sm:$0xf]
    %v133 = vld [vmem:[#allocation6 + $0x30] sm:$0xf]
    %v134 = vld [vmem:[#allocation6 + $0x34] sm:$0xf]
    %v135 = vld [vmem:[#allocation6 + $0x38] sm:$0xf]
    %v136 = vld [vmem:[#allocation6 + $0x3c] sm:$0xf]
    %v137 = vld [vmem:[%s4] sm:$0x1]
    %v139 = vperm.slane %v137, 0
    %v157 = vunpack.c.l.b16 %v121
    %v158 = vunpack.c.l.b16 %v122
    %v159 = vunpack.c.l.b16 %v123
    %v160 = vunpack.c.l.b16 %v124
    %v161 = vunpack.c.l.b16 %v125
    %v162 = vunpack.c.l.b16 %v126
    %v163 = vunpack.c.l.b16 %v127
    %v164 = vunpack.c.l.b16 %v128
    %v165 = vunpack.c.l.b16 %v129
    %v166 = vunpack.c.l.b16 %v130
    %v167 = vunpack.c.l.b16 %v131
    %v168 = vunpack.c.l.b16 %v132
    %v169 = vunpack.c.l.b16 %v133
    %v170 = vunpack.c.l.b16 %v134
    %v171 = vunpack.c.l.b16 %v135
    %v172 = vunpack.c.l.b16 %v136
    %v173 = vpack.c.b16 %v158, %v157
    %v174 = vpack.c.b16 %v160, %v159
    %v175 = vpack.c.b16 %v162, %v161
    %v176 = vpack.c.b16 %v164, %v163
    %v177 = vpack.c.b16 %v166, %v165
    %v178 = vpack.c.b16 %v168, %v167
    %v179 = vpack.c.b16 %v170, %v169
    %v180 = vpack.c.b16 %v172, %v171
    %189 = vmatpush.bf16.msra.mxu0 %v180
    %190 = vmatpush.bf16.msra.mxu0 %v179
    %191 = vmatpush.bf16.msra.mxu0 %v178
    %192 = vmatpush.bf16.msra.mxu0 %v177
    %193 = vmatpush.bf16.msra.mxu0 %v176
    %194 = vmatpush.bf16.msra.mxu0 %v175
    %195 = vmatpush.bf16.msra.mxu0 %v174
    %196 = vmatpush.bf16.msra.mxu0 %v173
    %197 = vmatmul.bf16.gmra.mxu0 %v120
    %v198 = vpop.f32.mrf.mxu0
    %v199 = vadd.f32 %v139, %v198
    %v200 = vpop.f32.mrf.mxu0
    %201 = vdwg.mxu0
    %v202 = vmax.f32 %v199, 0.0
    %v203 = vld [vmem:[#allocation7] sm:$0xff]
    %v204 = vld [vmem:[#allocation7 + $0x8] sm:$0xff]
    %v205 = vld [vmem:[#allocation7 + $0x10] sm:$0xff]
    %v206 = vld [vmem:[#allocation7 + $0x18] sm:$0xff]
    %v207 = vld [vmem:[#allocation7 + $0x20] sm:$0xff]
    %v208 = vld [vmem:[#allocation7 + $0x28] sm:$0xff]
    %v209 = vld [vmem:[#allocation7 + $0x30] sm:$0xff]
    %v210 = vld [vmem:[#allocation7 + $0x38] sm:$0xff]
    %v211 = vld [vmem:[#allocation7 + $0x40] sm:$0xff]
    %v212 = vld [vmem:[#allocation7 + $0x48] sm:$0xff]
    %v213 = vld [vmem:[#allocation7 + $0x50] sm:$0xff]
    %v214 = vld [vmem:[#allocation7 + $0x58] sm:$0xff]
    %v215 = vld [vmem:[#allocation7 + $0x60] sm:$0xff]
    %v216 = vld [vmem:[#allocation7 + $0x68] sm:$0xff]
    %v217 = vld [vmem:[#allocation7 + $0x70] sm:$0xff]
    %v218 = vld [vmem:[#allocation7 + $0x78] sm:$0xff]
    %219 = vmatpush.msra.mxu0 %v218
    %220 = vmatpush.msra.mxu0 %v217
    %221 = vmatpush.msra.mxu0 %v216
    %222 = vmatpush.msra.mxu0 %v215
    %223 = vmatpush.msra.mxu0 %v214
    %224 = vmatpush.msra.mxu0 %v213
    %225 = vmatpush.msra.mxu0 %v212
    %226 = vmatpush.msra.mxu0 %v211
    %227 = vmatpush.msra.mxu0 %v210
    %228 = vmatpush.msra.mxu0 %v209
    %229 = vmatpush.msra.mxu0 %v208
    %230 = vmatpush.msra.mxu0 %v207
    %231 = vmatpush.msra.mxu0 %v206
    %232 = vmatpush.msra.mxu0 %v205
    %233 = vmatpush.msra.mxu0 %v204
    %234 = vmatpush.msra.mxu0 %v203
    %235 = vmatmul.f32.gmra.mxu0 %v202
    %v236 = vpop.f32.mrf.mxu0
    %v237 = vadd.f32 0.0, %v236
    %238 = vdwg.mxu0
    %v239 = vld [vmem:[%s6] sm:$0x1]
    %v241 = vperm.slane %v239, 0
    %v243 = vadd.f32 %v237, %v241
    %vm244 = vcmask 31744
    %245 = vst.msk [vmem:[%s7] sm:$0xff] %vm244, %v243
    // Predicated region
    $region46: #{qnetwork_forward.1} parent=1 // pred_check
      _
    $region47: #{qnetwork_forward.1} parent=1 // pred_check_branch
      %247 = sbr.rel (0) target = $region49
    $region48: #{qnetwork_forward.1} parent=1 // pred_region
      _
    $region49: #{qnetwork_forward.1} parent=1 // pred_fallthru
      _
    // Predicated region
    $region50: #{qnetwork_forward.1} parent=1 // pred_check
      _
    $region51: #{qnetwork_forward.1} parent=1 // pred_check_branch
      %249 = sbr.rel (0) target = $region53
    $region52: #{qnetwork_forward.1} parent=1 // pred_region
      _
    $region53: #{qnetwork_forward.1} parent=1 // pred_fallthru
      _
    %250 = vsyncpa [#allocation3], 1
    %251 = vsyncpa [#allocation5], 1
    %252 = vsyncpa [#allocation8], 1

</llo_original>
